<compile_context>
chip_gen: v7x
topology: tpu7x:2x2x1
jax: 0.10.0
libtpu: 0.0.40
codegen_flags: <defaults>
</compile_context>

<pallas_src>
import functools

import jax
import jax.numpy as jnp
from jax.experimental import pallas as pl
from jax.experimental.pallas import tpu as pltpu


_LANE = 128
_SUBLANE = 8
_TN_CANDIDATES = (32768, 16384, 8192, 4096, 2048, 1024, 512, 256, 128)
_VMEM_TILE_BUDGET = 24 * 1024 * 1024   # per-step working-set budget (bytes)


def _round_up(x, m):
    return ((x + m - 1) // m) * m


def _ipow(z, p):
    """z**p for small static integer p >= 1 via repeated VPU multiplies."""
    p = int(p)
    assert p >= 1
    r = z
    for _ in range(p - 1):
        r = r * z
    return r


def _make_fused_kernel(pdegree):
    if int(pdegree) < 1:
        raise ValueError(f"pdegree must be a positive integer, got {pdegree}")

    def kernel(xT_ref, projT_ref, shift_ref, w_ref, o_ref):
        # xT_ref    : (gdim, TN)  query-point tile, points on lanes
        # projT_ref : (D, gdim)   synthetic basis projection (grid-resident)
        # shift_ref : (D, 1)      synthetic basis shift      (grid-resident)
        # w_ref     : (1, D)      lin.weight                 (grid-resident)
        # o_ref     : (1, TN)     lane-dense output tile
        #
        # Projection to the basis coordinate:  zT[d, n] = sum_g proj[g,d] x[n,g] + shift[d]
        # Runs on the MXU (frees the VPU, which is the binding unit here).
        zT = (
            jnp.dot(projT_ref[...], xT_ref[...], preferred_element_type=jnp.float32)
            + shift_ref[...]
        )                                                  # (D, TN)

        # TODO(synk): the real FEM Vandermonde (mesh cell lookup + reference-
        # element shape functions) has no Pallas equivalent without a mesh; a
        # deterministic polynomial basis of the same degree stands in for it.
        vT = zT + 0.5 * _ipow(zT, pdegree)                 # (D, TN)  pointwise, VPU

        # Dof contraction (the nn.Linear(D, 1, bias=False)):
        # out[n] = sum_d weight[0, d] * vand[n, d]  -> lane-dense (1, TN), MXU.
        o_ref[...] = jnp.dot(
            w_ref[...], vT, preferred_element_type=jnp.float32
        ).astype(o_ref.dtype)

    return kernel


def _tile_bytes(tn, d):
    """Rough per-grid-step VMEM working set (bytes) for lane-tile width `tn`."""
    d_pad = _round_up(d, _SUBLANE)
    io = 2 * (2 * _SUBLANE * tn * 4)      # x + out blocks, double-buffered, 8-sublane padded
    tmp = 3 * d_pad * tn * 4              # zT / vT / matmul temporaries (~3 live copies)
    return io + tmp


def _pick_tile(bn, d):
    """Largest lane tile that fits the VMEM budget; small problems get one block."""
    bn128 = _round_up(bn, _LANE)
    cap = _LANE
    for tn in _TN_CANDIDATES:             # descending
        if _tile_bytes(tn, d) <= _VMEM_TILE_BUDGET:
            cap = tn
            break
    if bn128 <= cap:
        return bn128                      # whole problem in a single block
    return cap


@functools.partial(jax.jit, static_argnames=("pdegree",))
def scalar_nn_forward(x, weight, proj, shift, pdegree=2):
    """out[b, n] = sum_d Phi(x)[b, n, d] * weight[0, d]  (== lin(vand).squeeze(2))"""
    B, N, gdim = x.shape
    gd2, D = proj.shape
    assert gd2 == gdim
    assert weight.shape == (1, D)
    assert shift.shape == (D,)

    BN = B * N
    TN = _pick_tile(BN, D)
    BN_pad = _round_up(BN, TN)

    # Layout plumbing: the kernel wants points on lanes (gdim-major).  This
    # transpose is one extra HBM pass over x; a production caller that can
    # supply points as (gdim, B*N) should do so and skip it.
    xT = jnp.transpose(x.reshape(BN, gdim))                # (gdim, BN)
    if BN_pad != BN:
        xT = jnp.pad(xT, ((0, 0), (0, BN_pad - BN)))

    # Raise the scoped-VMEM limit above the v5e 16 MiB default but stay well
    # under v7x's 64 MiB of physical VMEM.
    vmem_limit = int(min(48 * 1024 * 1024,
                         max(32 * 1024 * 1024, 2 * _tile_bytes(TN, D))))

    out2 = pl.pallas_call(
        _make_fused_kernel(pdegree),
        out_shape=jax.ShapeDtypeStruct((1, BN_pad), x.dtype),
        grid_spec=pltpu.PrefetchScalarGridSpec(
            num_scalar_prefetch=0,
            grid=(BN_pad // TN,),
            in_specs=[
                pl.BlockSpec((gdim, TN), lambda i: (0, i)),
                pl.BlockSpec((D, gdim), lambda i: (0, 0)),   # resident across grid
                pl.BlockSpec((D, 1), lambda i: (0, 0)),      # resident across grid
                pl.BlockSpec((1, D), lambda i: (0, 0)),      # resident across grid
            ],
            out_specs=pl.BlockSpec((1, TN), lambda i: (0, i)),
        ),
        compiler_params=pltpu.CompilerParams(
            dimension_semantics=("parallel",),
            vmem_limit_bytes=vmem_limit,
        ),
    )(xT, proj.T, shift.reshape(D, 1), weight)

    return out2[0, :BN].reshape(B, N)


if __name__ == "__main__":
    key = jax.random.PRNGKey(0)
    B, N, GDIM, D = 2, 256, 2, 32  # D == V.dim()  (number of FE dofs)

    k_x, k_w, k_p, k_s = jax.random.split(key, 4)
    x = jax.random.uniform(k_x, (B, N, GDIM), dtype=jnp.float32)          # query points
    weight = jax.random.normal(k_w, (1, D), dtype=jnp.float32) * 0.1      # lin.weight (1, D), no bias
    proj = jax.random.normal(k_p, (GDIM, D), dtype=jnp.float32)           # synthetic basis params
    shift = jax.random.normal(k_s, (D,), dtype=jnp.float32) * 0.1

    out = jax.block_until_ready(scalar_nn_forward(x, weight, proj, shift, pdegree=2))

    # pure-JAX reference (same synthetic basis, same contraction)
    z_ref = jnp.einsum("bng,gd->bnd", x, proj) + shift
    vand_ref = z_ref + 0.5 * z_ref**2
    ref = jnp.einsum("bnd,od->bno", vand_ref, weight)[..., 0]

    assert out.shape == (B, N)
    assert jnp.allclose(out, ref, atol=1e-4, rtol=1e-4)

    print("KERNEL_OK")
</pallas_src>

<mosaic_0001>
module attributes {stable_mosaic.version = 11 : i64} {
  func.func @kernel(%arg0: i32, %arg1: memref<2x512xf32, #tpu.memory_space<vmem>>, %arg2: memref<32x2xf32, #tpu.memory_space<vmem>>, %arg3: memref<32x1xf32, #tpu.memory_space<vmem>>, %arg4: memref<1x32xf32, #tpu.memory_space<vmem>>, %arg5: memref<1x512xf32, #tpu.memory_space<vmem>>) attributes {dimension_semantics = [#tpu.dimension_semantics<parallel>], iteration_bounds = array<i64: 1>, scalar_prefetch = 0 : i64, scratch_operands = 0 : i64, tpu.core_type = #tpu.core_type<tc>, window_params = [{transform_indices = @transform_0, window_bounds = array<i64: 2, 512>}, {pipeline_mode = #tpu.pipeline_mode<synchronous>, transform_indices = @transform_1, window_bounds = array<i64: 32, 2>}, {pipeline_mode = #tpu.pipeline_mode<synchronous>, transform_indices = @transform_2, window_bounds = array<i64: 32, 1>}, {pipeline_mode = #tpu.pipeline_mode<synchronous>, transform_indices = @transform_3, window_bounds = array<i64: 1, 32>}, {transform_indices = @transform_4, window_bounds = array<i64: 1, 512>}]} {
    %c0 = arith.constant 0 : index
    %c0_0 = arith.constant 0 : index
    %0 = vector.load %arg2[%c0, %c0_0] : memref<32x2xf32, #tpu.memory_space<vmem>>, vector<32x2xf32>
    %c0_1 = arith.constant 0 : index
    %c0_2 = arith.constant 0 : index
    %1 = vector.load %arg1[%c0_1, %c0_2] : memref<2x512xf32, #tpu.memory_space<vmem>>, vector<2x512xf32>
    %cst = arith.constant dense<0.000000e+00> : vector<32x512xf32>
    %2 = tpu.matmul %0, %1, %cst {dimension_numbers = #tpu.dot_dimension_numbers<[1], [0], [0], [1], [0, 0, 1, 1], [], []>} : vector<32x2xf32>, vector<2x512xf32>, vector<32x512xf32> -> vector<32x512xf32>
    %c0_3 = arith.constant 0 : index
    %c0_4 = arith.constant 0 : index
    %3 = vector.load %arg3[%c0_3, %c0_4] : memref<32x1xf32, #tpu.memory_space<vmem>>, vector<32x1xf32>
    %4 = vector.broadcast %3 : vector<32x1xf32> to vector<32x512xf32>
    %5 = arith.addf %2, %4 : vector<32x512xf32>
    %6 = arith.mulf %5, %5 : vector<32x512xf32>
    %cst_5 = arith.constant 5.000000e-01 : f32
    %7 = vector.broadcast %cst_5 : f32 to vector<32x512xf32>
    %8 = arith.mulf %7, %6 : vector<32x512xf32>
    %9 = arith.addf %5, %8 : vector<32x512xf32>
    %c0_6 = arith.constant 0 : index
    %c0_7 = arith.constant 0 : index
    %10 = vector.load %arg4[%c0_6, %c0_7] : memref<1x32xf32, #tpu.memory_space<vmem>>, vector<1x32xf32>
    %cst_8 = arith.constant dense<0.000000e+00> : vector<1x512xf32>
    %11 = tpu.matmul %10, %9, %cst_8 {dimension_numbers = #tpu.dot_dimension_numbers<[1], [0], [0], [1], [0, 0, 1, 1], [], []>} : vector<1x32xf32>, vector<32x512xf32>, vector<1x512xf32> -> vector<1x512xf32>
    %c0_9 = arith.constant 0 : index
    %c0_10 = arith.constant 0 : index
    %12 = vector.load %arg5[%c0_9, %c0_10] : memref<1x512xf32, #tpu.memory_space<vmem>>, vector<1x512xf32>
    tpu.vector_store %arg5[%c0_9, %c0_10], %11 {strides = array<i32>} : memref<1x512xf32, #tpu.memory_space<vmem>>, vector<1x512xf32>,
    return
  }
  func.func @transform_0(%arg0: i32) -> (i32, i32) {
    %c0_i32 = arith.constant 0 : i32
    %c0_i32_0 = arith.constant 0 : i32
    return %c0_i32, %arg0 : i32, i32
  }
  func.func @transform_1(%arg0: i32) -> (i32, i32) {
    %c0_i32 = arith.constant 0 : i32
    %c0_i32_0 = arith.constant 0 : i32
    %c0_i32_1 = arith.constant 0 : i32
    return %c0_i32, %c0_i32_0 : i32, i32
  }
  func.func @transform_2(%arg0: i32) -> (i32, i32) {
    %c0_i32 = arith.constant 0 : i32
    %c0_i32_0 = arith.constant 0 : i32
    %c0_i32_1 = arith.constant 0 : i32
    return %c0_i32, %c0_i32_0 : i32, i32
  }
  func.func @transform_3(%arg0: i32) -> (i32, i32) {
    %c0_i32 = arith.constant 0 : i32
    %c0_i32_0 = arith.constant 0 : i32
    %c0_i32_1 = arith.constant 0 : i32
    return %c0_i32, %c0_i32_0 : i32, i32
  }
  func.func @transform_4(%arg0: i32) -> (i32, i32) {
    %c0_i32 = arith.constant 0 : i32
    %c0_i32_0 = arith.constant 0 : i32
    return %c0_i32, %arg0 : i32, i32
  }
}

</mosaic_0001>

<llo_original>
// kernel: squeeze.1
$region0: #{squeeze.1}
  %s0 = inlined_call_operand.vmem [shape: f32[512], index: 0, kind: input, shape index: {}]
  %s1 = inlined_call_operand.hbm [shape: f32[2,256], index: 1, kind: output, shape index: {}]
  $region1: #{squeeze.1} parent=0
    #allocation0 [shape = 'u8[2048]{0}', space=vmem, size = 0x800, scoped, tag = 'operand span for operand 1']
    #allocation1 [shape = 's32[1]{0}', space=sflag, size = 0x4, scoped, tag = 'scoped memory for squeeze.1']
    #allocation2 [shape = 'u8[8192]{0}', space=vmem, size = 0x2000, scoped, tag = 'scoped mem for output reshape']
    #allocation3 [shape = 'u8[4096]{0}', space=vmem, size = 0x1000, scoped, tag = 'scoped mem for input reshape']
    %2 = vsyncpa [#allocation1], 0
    %s4 = sshllo.u32 0, 4
    %v5 = vld [vmem:[%s0] sm:%s4]
    %6 = vst [vmem:[#allocation3] sm:%s4] %v5
    %v7 = vld [vmem:[#allocation3] sm:$0xf]
    %8 = vst [vmem:[#allocation2] ss:$8 sm:$0x3] %v7
    %s9 = scalar_lea.vmem [#allocation2], 4294967281
    %10 = vst [vmem:[%s9] ss:$8 sm:$0xc] %v7
    %s12 = sshllo.u32 0, 2
    %v14 = vld [vmem:[#allocation2] sm:%s12]
    %s15 = sshllo.u32 0, 2
    %16 = vst [vmem:[#allocation0] sm:%s15] %v14
    %s17 = scalar_lea.vmem [#allocation2], 8
    %v18 = vld [vmem:[%s17] sm:%s12]
    %s19 = sshllo.u32 0, 2
    %s20 = scalar_lea.vmem [#allocation0], 2
    %21 = vst [vmem:[%s20] sm:%s19] %v18
    %s23 = ssub.s32 64, 64
    %24 = vsyncadd [#allocation1], %s23
    %s26 = sshll.u32 [#allocation0], 4
    %s27 = int_to_ptr.vmem [resolvable:$true] %s26
    %29 = dma.vmem_to_hbm [thread:$0]  %s27, 64, %s1, [#allocation1]
    %30 = dma.done [#allocation1], 64
    %31 = vsyncpa [#allocation1], 1

// kernel: scalar_nn_forward.1
$region0: #{scalar_nn_forward.1}
  #allocation0 [shape = 'u32[]', space=smem, size = 0x4, offset = 0x4, fixed_abs, tag = 'smem constant byte address 0x4 - core index']
  #allocation1 [shape = 'u32[144,128]{1,0:T(1,128)}', space=vmem, size = 0x12000, scoped, tag = 'internal scratch']
  %s0 = inlined_call_operand.vmem [shape: f32[2,512], index: 0, kind: input, shape index: {}]
  %s1 = inlined_call_operand.vmem [shape: f32[32,2], index: 1, kind: input, shape index: {}]
  %s2 = inlined_call_operand.vmem [shape: f32[32,1], index: 2, kind: input, shape index: {}]
  %s3 = inlined_call_operand.vmem [shape: f32[1,32], index: 3, kind: input, shape index: {}]
  %s4 = inlined_call_operand.vmem [shape: f32[1,512], index: 4, kind: output, shape index: {}]
  %s5 = sld [smem:[#allocation0]]
  $region26: #{scalar_nn_forward.1} parent=0
    _
  %s7 = ssub.s32 1, %s5
  %s8 = scalar_select 0, %s7, %s5
  // Predicated region
  $region2: #{scalar_nn_forward.1} parent=0 // pred_check
    _
  $region3: #{scalar_nn_forward.1} parent=0 // pred_check_branch
    %10 = sbr.rel (0) target = $region5
  $region4: #{scalar_nn_forward.1} parent=0 // pred_region
    _
  $region5: #{scalar_nn_forward.1} parent=0 // pred_fallthru
    _
  // Predicated region
  $region6: #{scalar_nn_forward.1} parent=0 // pred_check
    _
  $region7: #{scalar_nn_forward.1} parent=0 // pred_check_branch
    %12 = sbr.rel (0) target = $region9
  $region8: #{scalar_nn_forward.1} parent=0 // pred_region
    _
  $region9: #{scalar_nn_forward.1} parent=0 // pred_fallthru
    _
  // Predicated region
  $region10: #{scalar_nn_forward.1} parent=0 // pred_check
    _
  $region11: #{scalar_nn_forward.1} parent=0 // pred_check_branch
    %14 = sbr.rel (0) target = $region13
  $region12: #{scalar_nn_forward.1} parent=0 // pred_region
    _
  $region13: #{scalar_nn_forward.1} parent=0 // pred_fallthru
    _
  // Predicated region
  $region14: #{scalar_nn_forward.1} parent=0 // pred_check
    _
  $region15: #{scalar_nn_forward.1} parent=0 // pred_check_branch
    %16 = sbr.rel (0) target = $region17
  $region16: #{scalar_nn_forward.1} parent=0 // pred_region
    _
  $region17: #{scalar_nn_forward.1} parent=0 // pred_fallthru
    _
  %v17 = vld [vmem:[%s1] sm:$0xff]
  %v18 = vld [vmem:[%s1 + $0x8] sm:$0xff]
  %v19 = vld [vmem:[%s1 + $0x10] sm:$0xff]
  %v20 = vld [vmem:[%s1 + $0x18] sm:$0xff]
  %v21 = vld [vmem:[%s0] sm:$0xff]
  %v22 = vld [vmem:[%s2] sm:$0xff]
  %v23 = vld [vmem:[%s2 + $0x8] sm:$0xff]
  %v24 = vld [vmem:[%s2 + $0x10] sm:$0xff]
  %v25 = vld [vmem:[%s2 + $0x18] sm:$0xff]
  %27 = vset.pattern.permute.xlu0 0
  %28 = vperm.xlu0 %27, %v22
  %v29 = vpop.permute.xlu0 %28
  %32 = vset.pattern.permute.xlu0 0
  %33 = vperm.xlu0 %32, %v23
  %v34 = vpop.permute.xlu0 %33
  %37 = vset.pattern.permute.xlu0 0
  %38 = vperm.xlu0 %37, %v24
  %v39 = vpop.permute.xlu0 %38
  %42 = vset.pattern.permute.xlu0 0
  %43 = vperm.xlu0 %42, %v25
  %v44 = vpop.permute.xlu0 %43
  %v47 = vcombine.high %v21, %v21
  %v49 = vunpack.c.l.s4 1983009808
  %v50 = vunpack.c.0.s8 %v49
  %v51 = vlaneseq
  %v52 = vshrl.u32 %v51, 7
  %v53 = vsub.s32 %v50, %v52
  %v54 = vrot.slane %v21, %v53
  %v56 = vunpack.c.l.s4 1983009808
  %v57 = vunpack.c.0.s8 %v56
  %v58 = vlaneseq
  %v59 = vshrl.u32 %v58, 7
  %v60 = vsub.s32 %v57, %v59
  %v61 = vrot.slane %v47, %v60
  %v62 = vcombine.high %v54, %v54
  %v63 = vcombine.high %v61, %v61
  %vm64 = vcmask 15360
  %v66 = vsel %vm64, %v17, 0
  %v69 = vsel %vm64, %v18, 0
  %v72 = vsel %vm64, %v19, 0
  %v75 = vsel %vm64, %v20, 0
  %vm77 = vcmask 1041408
  %v78 = vsel %vm77, %v54, 0
  %v80 = vsel %vm77, %v62, 0
  %v82 = vsel %vm77, %v61, 0
  %v84 = vsel %vm77, %v63, 0
  %86 = vmatprep.subr.mxu0 %v80
  %87 = vmatpush1.msra.mxu0 %v78
  %88 = vmatprep.subr.mxu0 0.0
  %89 = vmatpush1.msra.mxu0 0.0
  %90 = vmatprep.subr.mxu0 0.0
  %91 = vmatpush1.msra.mxu0 0.0
  %92 = vmatprep.subr.mxu0 0.0
  %93 = vmatpush1.msra.mxu0 0.0
  %94 = vmatprep.subr.mxu0 0.0
  %95 = vmatpush1.msra.mxu0 0.0
  %96 = vmatprep.subr.mxu0 0.0
  %97 = vmatpush1.msra.mxu0 0.0
  %98 = vmatprep.subr.mxu0 0.0
  %99 = vmatpush1.msra.mxu0 0.0
  %100 = vmatprep.subr.mxu0 0.0
  %101 = vmatpush1.msra.mxu0 0.0
  %102 = vmatprep.subr.mxu0 0.0
  %103 = vmatpush1.msra.mxu0 0.0
  %104 = vmatprep.subr.mxu0 0.0
  %105 = vmatpush1.msra.mxu0 0.0
  %106 = vmatprep.subr.mxu0 0.0
  %107 = vmatpush1.msra.mxu0 0.0
  %108 = vmatprep.subr.mxu0 0.0
  %109 = vmatpush1.msra.mxu0 0.0
  %110 = vmatprep.subr.mxu0 0.0
  %111 = vmatpush1.msra.mxu0 0.0
  %112 = vmatprep.subr.mxu0 0.0
  %113 = vmatpush1.msra.mxu0 0.0
  %114 = vmatprep.subr.mxu0 0.0
  %115 = vmatpush1.msra.mxu0 0.0
  %116 = vmatprep.subr.mxu0 0.0
  %117 = vmatpush1.msra.mxu0 0.0
  %118 = vmatprep.subr.mxu0 0.0
  %119 = vmatpush1.msra.mxu0 0.0
  %120 = vmatprep.subr.mxu0 0.0
  %121 = vmatpush1.msra.mxu0 0.0
  %122 = vmatprep.subr.mxu0 0.0
  %123 = vmatpush1.msra.mxu0 0.0
  %124 = vmatprep.subr.mxu0 0.0
  %125 = vmatpush1.msra.mxu0 0.0
  %126 = vmatprep.subr.mxu0 0.0
  %127 = vmatpush1.msra.mxu0 0.0
  %128 = vmatprep.subr.mxu0 0.0
  %129 = vmatpush1.msra.mxu0 0.0
  %130 = vmatprep.subr.mxu0 0.0
  %131 = vmatpush1.msra.mxu0 0.0
  %132 = vmatprep.subr.mxu0 0.0
  %133 = vmatpush1.msra.mxu0 0.0
  %134 = vmatprep.subr.mxu0 0.0
  %135 = vmatpush1.msra.mxu0 0.0
  %136 = vmatprep.subr.mxu0 0.0
  %137 = vmatpush1.msra.mxu0 0.0
  %138 = vmatprep.subr.mxu0 0.0
  %139 = vmatpush1.msra.mxu0 0.0
  %140 = vmatprep.subr.mxu0 0.0
  %141 = vmatpush1.msra.mxu0 0.0
  %142 = vmatprep.subr.mxu0 0.0
  %143 = vmatpush1.msra.mxu0 0.0
  %144 = vmatprep.subr.mxu0 0.0
  %145 = vmatpush1.msra.mxu0 0.0
  %146 = vmatprep.subr.mxu0 0.0
  %147 = vmatpush1.msra.mxu0 0.0
  %148 = vmatprep.subr.mxu0 0.0
  %149 = vmatpush1.msra.mxu0 0.0
  %150 = vmatprep.mubr.f32.mxu0 0.0
  %151 = vmatmul.mubr.f32.gmra.mrb[0].mxu0 %v66
  %v152 = vpop.f32.mrb[0].mxu0
  %v153 = vadd.f32 %v29, %v152
  %v154 = vpop.f32.mrb[0].mxu0
  %v155 = vadd.f32 %v29, %v154
  %156 = vmatprep.mubr.f32.mxu0 0.0
  %157 = vmatmul.mubr.f32.gmra.mrb[0].mxu0 %v69
  %v158 = vpop.f32.mrb[0].mxu0
  %v159 = vadd.f32 %v34, %v158
  %v160 = vpop.f32.mrb[0].mxu0
  %v161 = vadd.f32 %v34, %v160
  %162 = vmatprep.mubr.f32.mxu0 0.0
  %163 = vmatmul.mubr.f32.gmra.mrb[0].mxu0 %v72
  %v164 = vpop.f32.mrb[0].mxu0
  %v165 = vadd.f32 %v39, %v164
  %v166 = vpop.f32.mrb[0].mxu0
  %v167 = vadd.f32 %v39, %v166
  %168 = vmatprep.mubr.f32.mxu0 0.0
  %169 = vmatmul.mubr.f32.gmra.mrb[0].mxu0 %v75
  %v170 = vpop.f32.mrb[0].mxu0
  %v171 = vadd.f32 %v44, %v170
  %v172 = vpop.f32.mrb[0].mxu0
  %v173 = vadd.f32 %v44, %v172
  %174 = vdwg.mxu0
  %175 = vmatprep.subr.mxu0 %v84
  %176 = vmatpush1.msra.mxu0 %v82
  %177 = vmatprep.subr.mxu0 0.0
  %178 = vmatpush1.msra.mxu0 0.0
  %179 = vmatprep.subr.mxu0 0.0
  %180 = vmatpush1.msra.mxu0 0.0
  %181 = vmatprep.subr.mxu0 0.0
  %182 = vmatpush1.msra.mxu0 0.0
  %183 = vmatprep.subr.mxu0 0.0
  %184 = vmatpush1.msra.mxu0 0.0
  %185 = vmatprep.subr.mxu0 0.0
  %186 = vmatpush1.msra.mxu0 0.0
  %187 = vmatprep.subr.mxu0 0.0
  %188 = vmatpush1.msra.mxu0 0.0
  %189 = vmatprep.subr.mxu0 0.0
  %190 = vmatpush1.msra.mxu0 0.0
  %191 = vmatprep.subr.mxu0 0.0
  %192 = vmatpush1.msra.mxu0 0.0
  %193 = vmatprep.subr.mxu0 0.0
  %194 = vmatpush1.msra.mxu0 0.0
  %195 = vmatprep.subr.mxu0 0.0
  %196 = vmatpush1.msra.mxu0 0.0
  %197 = vmatprep.subr.mxu0 0.0
  %198 = vmatpush1.msra.mxu0 0.0
  %199 = vmatprep.subr.mxu0 0.0
  %200 = vmatpush1.msra.mxu0 0.0
  %201 = vmatprep.subr.mxu0 0.0
  %202 = vmatpush1.msra.mxu0 0.0
  %203 = vmatprep.subr.mxu0 0.0
  %204 = vmatpush1.msra.mxu0 0.0
  %205 = vmatprep.subr.mxu0 0.0
  %206 = vmatpush1.msra.mxu0 0.0
  %207 = vmatprep.subr.mxu0 0.0
  %208 = vmatpush1.msra.mxu0 0.0
  %209 = vmatprep.subr.mxu0 0.0
  %210 = vmatpush1.msra.mxu0 0.0
  %211 = vmatprep.subr.mxu0 0.0
  %212 = vmatpush1.msra.mxu0 0.0
  %213 = vmatprep.subr.mxu0 0.0
  %214 = vmatpush1.msra.mxu0 0.0
  %215 = vmatprep.subr.mxu0 0.0
  %216 = vmatpush1.msra.mxu0 0.0
  %217 = vmatprep.subr.mxu0 0.0
  %218 = vmatpush1.msra.mxu0 0.0
  %219 = vmatprep.subr.mxu0 0.0
  %220 = vmatpush1.msra.mxu0 0.0
  %221 = vmatprep.subr.mxu0 0.0
  %222 = vmatpush1.msra.mxu0 0.0
  %223 = vmatprep.subr.mxu0 0.0
  %224 = vmatpush1.msra.mxu0 0.0
  %225 = vmatprep.subr.mxu0 0.0
  %226 = vmatpush1.msra.mxu0 0.0
  %227 = vmatprep.subr.mxu0 0.0
  %228 = vmatpush1.msra.mxu0 0.0
  %229 = vmatprep.subr.mxu0 0.0
  %230 = vmatpush1.msra.mxu0 0.0
  %231 = vmatprep.subr.mxu0 0.0
  %232 = vmatpush1.msra.mxu0 0.0
  %233 = vmatprep.subr.mxu0 0.0
  %234 = vmatpush1.msra.mxu0 0.0
  %235 = vmatprep.subr.mxu0 0.0
  %236 = vmatpush1.msra.mxu0 0.0
  %237 = vmatprep.subr.mxu0 0.0
  %238 = vmatpush1.msra.mxu0 0.0
  %239 = vmatprep.mubr.f32.mxu0 0.0
  %240 = vmatmul.mubr.f32.gmra.mrb[0].mxu0 %v66
  %v241 = vpop.f32.mrb[0].mxu0
  %v242 = vadd.f32 %v29, %v241
  %v243 = vpop.f32.mrb[0].mxu0
  %v244 = vadd.f32 %v29, %v243
  %245 = vmatprep.mubr.f32.mxu0 0.0
  %246 = vmatmul.mubr.f32.gmra.mrb[0].mxu0 %v69
  %v247 = vpop.f32.mrb[0].mxu0
  %v248 = vadd.f32 %v34, %v247
  %v249 = vpop.f32.mrb[0].mxu0
  %v250 = vadd.f32 %v34, %v249
  %251 = vmatprep.mubr.f32.mxu0 0.0
  %252 = vmatmul.mubr.f32.gmra.mrb[0].mxu0 %v72
  %v253 = vpop.f32.mrb[0].mxu0
  %v254 = vadd.f32 %v39, %v253
  %v255 = vpop.f32.mrb[0].mxu0
  %v256 = vadd.f32 %v39, %v255
  %257 = vmatprep.mubr.f32.mxu0 0.0
  %258 = vmatmul.mubr.f32.gmra.mrb[0].mxu0 %v75
  %v259 = vpop.f32.mrb[0].mxu0
  %v260 = vadd.f32 %v44, %v259
  %v261 = vpop.f32.mrb[0].mxu0
  %v262 = vadd.f32 %v44, %v261
  %263 = vdwg.mxu0
  %v264 = vmul.f32 %v153, %v153
  %v265 = vmul.f32 %v155, %v155
  %v266 = vmul.f32 %v242, %v242
  %v267 = vmul.f32 %v244, %v244
  %v268 = vmul.f32 %v159, %v159
  %v269 = vmul.f32 %v161, %v161
  %v270 = vmul.f32 %v248, %v248
  %v271 = vmul.f32 %v250, %v250
  %v272 = vmul.f32 %v165, %v165
  %v273 = vmul.f32 %v167, %v167
  %v274 = vmul.f32 %v254, %v254
  %v275 = vmul.f32 %v256, %v256
  %v276 = vmul.f32 %v171, %v171
  %v277 = vmul.f32 %v173, %v173
  %v278 = vmul.f32 %v260, %v260
  %v279 = vmul.f32 %v262, %v262
  %v280 = vmul.f32 %v264, 0.5
  %v281 = vmul.f32 %v265, 0.5
  %v282 = vmul.f32 %v266, 0.5
  %v283 = vmul.f32 %v267, 0.5
  %v284 = vmul.f32 %v268, 0.5
  %v285 = vmul.f32 %v269, 0.5
  %v286 = vmul.f32 %v270, 0.5
  %v287 = vmul.f32 %v271, 0.5
  %v288 = vmul.f32 %v272, 0.5
  %v289 = vmul.f32 %v273, 0.5
  %v290 = vmul.f32 %v274, 0.5
  %v291 = vmul.f32 %v275, 0.5
  %v292 = vmul.f32 %v276, 0.5
  %v293 = vmul.f32 %v277, 0.5
  %v294 = vmul.f32 %v278, 0.5
  %v295 = vmul.f32 %v279, 0.5
  %v296 = vadd.f32 %v153, %v280
  %v297 = vadd.f32 %v155, %v281
  %v298 = vadd.f32 %v242, %v282
  %v299 = vadd.f32 %v244, %v283
  %v300 = vadd.f32 %v159, %v284
  %v301 = vadd.f32 %v161, %v285
  %v302 = vadd.f32 %v248, %v286
  %v303 = vadd.f32 %v250, %v287
  %v304 = vadd.f32 %v165, %v288
  %v305 = vadd.f32 %v167, %v289
  %v306 = vadd.f32 %v254, %v290
  %v307 = vadd.f32 %v256, %v291
  %v308 = vadd.f32 %v171, %v292
  %v309 = vadd.f32 %v173, %v293
  %v310 = vadd.f32 %v260, %v294
  %v311 = vadd.f32 %v262, %v295
  %v312 = vld [vmem:[%s3] sm:$0x1]
  %vm313 = vcmask 261120
  %v315 = vsel %vm313, %v312, 0
  %317 = vmatprep.subr.mxu0 %v297
  %318 = vmatpush1.msra.mxu0 %v296
  %319 = vmatprep.subr.mxu0 %v301
  %320 = vmatpush1.msra.mxu0 %v300
  %321 = vmatprep.subr.mxu0 %v305
  %322 = vmatpush1.msra.mxu0 %v304
  %323 = vmatprep.subr.mxu0 %v309
  %324 = vmatpush1.msra.mxu0 %v308
  %325 = vmatprep.subr.mxu0 0.0
  %326 = vmatpush1.msra.mxu0 0.0
  %327 = vmatprep.subr.mxu0 0.0
  %328 = vmatpush1.msra.mxu0 0.0
  %329 = vmatprep.subr.mxu0 0.0
  %330 = vmatpush1.msra.mxu0 0.0
  %331 = vmatprep.subr.mxu0 0.0
  %332 = vmatpush1.msra.mxu0 0.0
  %333 = vmatprep.subr.mxu0 0.0
  %334 = vmatpush1.msra.mxu0 0.0
  %335 = vmatprep.subr.mxu0 0.0
  %336 = vmatpush1.msra.mxu0 0.0
  %337 = vmatprep.subr.mxu0 0.0
  %338 = vmatpush1.msra.mxu0 0.0
  %339 = vmatprep.subr.mxu0 0.0
  %340 = vmatpush1.msra.mxu0 0.0
  %341 = vmatprep.subr.mxu0 0.0
  %342 = vmatpush1.msra.mxu0 0.0
  %343 = vmatprep.subr.mxu0 0.0
  %344 = vmatpush1.msra.mxu0 0.0
  %345 = vmatprep.subr.mxu0 0.0
  %346 = vmatpush1.msra.mxu0 0.0
  %347 = vmatprep.subr.mxu0 0.0
  %348 = vmatpush1.msra.mxu0 0.0
  %349 = vmatprep.subr.mxu0 0.0
  %350 = vmatpush1.msra.mxu0 0.0
  %351 = vmatprep.subr.mxu0 0.0
  %352 = vmatpush1.msra.mxu0 0.0
  %353 = vmatprep.subr.mxu0 0.0
  %354 = vmatpush1.msra.mxu0 0.0
  %355 = vmatprep.subr.mxu0 0.0
  %356 = vmatpush1.msra.mxu0 0.0
  %357 = vmatprep.subr.mxu0 0.0
  %358 = vmatpush1.msra.mxu0 0.0
  %359 = vmatprep.subr.mxu0 0.0
  %360 = vmatpush1.msra.mxu0 0.0
  %361 = vmatprep.subr.mxu0 0.0
  %362 = vmatpush1.msra.mxu0 0.0
  %363 = vmatprep.subr.mxu0 0.0
  %364 = vmatpush1.msra.mxu0 0.0
  %365 = vmatprep.subr.mxu0 0.0
  %366 = vmatpush1.msra.mxu0 0.0
  %367 = vmatprep.subr.mxu0 0.0
  %368 = vmatpush1.msra.mxu0 0.0
  %369 = vmatprep.subr.mxu0 0.0
  %370 = vmatpush1.msra.mxu0 0.0
  %371 = vmatprep.subr.mxu0 0.0
  %372 = vmatpush1.msra.mxu0 0.0
  %373 = vmatprep.subr.mxu0 0.0
  %374 = vmatpush1.msra.mxu0 0.0
  %375 = vmatprep.subr.mxu0 0.0
  %376 = vmatpush1.msra.mxu0 0.0
  %377 = vmatprep.subr.mxu0 0.0
  %378 = vmatpush1.msra.mxu0 0.0
  %379 = vmatprep.subr.mxu0 0.0
  %380 = vmatpush1.msra.mxu0 0.0
  %381 = vmatprep.mubr.f32.mxu0 0.0
  %382 = vmatmul.mubr.f32.gmra.mrb[0].mxu0 %v315
  %v383 = vpop.f32.mrb[0].mxu0
  %v384 = vadd.f32 0.0, %v383
  %v385 = vpop.f32.mrb[0].mxu0
  %v386 = vadd.f32 0.0, %v385
  %387 = vdwg.mxu0
  %388 = vmatprep.subr.mxu0 %v299
  %389 = vmatpush1.msra.mxu0 %v298
  %390 = vmatprep.subr.mxu0 %v303
  %391 = vmatpush1.msra.mxu0 %v302
  %392 = vmatprep.subr.mxu0 %v307
  %393 = vmatpush1.msra.mxu0 %v306
  %394 = vmatprep.subr.mxu0 %v311
  %395 = vmatpush1.msra.mxu0 %v310
  %396 = vmatprep.subr.mxu0 0.0
  %397 = vmatpush1.msra.mxu0 0.0
  %398 = vmatprep.subr.mxu0 0.0
  %399 = vmatpush1.msra.mxu0 0.0
  %400 = vmatprep.subr.mxu0 0.0
  %401 = vmatpush1.msra.mxu0 0.0
  %402 = vmatprep.subr.mxu0 0.0
  %403 = vmatpush1.msra.mxu0 0.0
  %404 = vmatprep.subr.mxu0 0.0
  %405 = vmatpush1.msra.mxu0 0.0
  %406 = vmatprep.subr.mxu0 0.0
  %407 = vmatpush1.msra.mxu0 0.0
  %408 = vmatprep.subr.mxu0 0.0
  %409 = vmatpush1.msra.mxu0 0.0
  %410 = vmatprep.subr.mxu0 0.0
  %411 = vmatpush1.msra.mxu0 0.0
  %412 = vmatprep.subr.mxu0 0.0
  %413 = vmatpush1.msra.mxu0 0.0
  %414 = vmatprep.subr.mxu0 0.0
  %415 = vmatpush1.msra.mxu0 0.0
  %416 = vmatprep.subr.mxu0 0.0
  %417 = vmatpush1.msra.mxu0 0.0
  %418 = vmatprep.subr.mxu0 0.0
  %419 = vmatpush1.msra.mxu0 0.0
  %420 = vmatprep.subr.mxu0 0.0
  %421 = vmatpush1.msra.mxu0 0.0
  %422 = vmatprep.subr.mxu0 0.0
  %423 = vmatpush1.msra.mxu0 0.0
  %424 = vmatprep.subr.mxu0 0.0
  %425 = vmatpush1.msra.mxu0 0.0
  %426 = vmatprep.subr.mxu0 0.0
  %427 = vmatpush1.msra.mxu0 0.0
  %428 = vmatprep.subr.mxu0 0.0
  %429 = vmatpush1.msra.mxu0 0.0
  %430 = vmatprep.subr.mxu0 0.0
  %431 = vmatpush1.msra.mxu0 0.0
  %432 = vmatprep.subr.mxu0 0.0
  %433 = vmatpush1.msra.mxu0 0.0
  %434 = vmatprep.subr.mxu0 0.0
  %435 = vmatpush1.msra.mxu0 0.0
  %436 = vmatprep.subr.mxu0 0.0
  %437 = vmatpush1.msra.mxu0 0.0
  %438 = vmatprep.subr.mxu0 0.0
  %439 = vmatpush1.msra.mxu0 0.0
  %440 = vmatprep.subr.mxu0 0.0
  %441 = vmatpush1.msra.mxu0 0.0
  %442 = vmatprep.subr.mxu0 0.0
  %443 = vmatpush1.msra.mxu0 0.0
  %444 = vmatprep.subr.mxu0 0.0
  %445 = vmatpush1.msra.mxu0 0.0
  %446 = vmatprep.subr.mxu0 0.0
  %447 = vmatpush1.msra.mxu0 0.0
  %448 = vmatprep.subr.mxu0 0.0
  %449 = vmatpush1.msra.mxu0 0.0
  %450 = vmatprep.subr.mxu0 0.0
  %451 = vmatpush1.msra.mxu0 0.0
  %452 = vmatprep.mubr.f32.mxu0 0.0
  %453 = vmatmul.mubr.f32.gmra.mrb[0].mxu0 %v315
  %v454 = vpop.f32.mrb[0].mxu0
  %v455 = vadd.f32 0.0, %v454
  %v456 = vpop.f32.mrb[0].mxu0
  %v457 = vadd.f32 0.0, %v456
  %458 = vdwg.mxu0
  %v463 = vcombine.low %v384, %v386
  %v464 = vcombine.low %v455, %v457
  %v466 = vunpack.c.l.s4 1966171168
  %v467 = vunpack.c.0.s8 %v466
  %v468 = vlaneseq
  %v469 = vshrl.u32 %v468, 7
  %v470 = vsub.s32 %v467, %v469
  %v471 = vrot.slane %v463, %v470
  %v473 = vunpack.c.l.s4 1966171168
  %v474 = vunpack.c.0.s8 %v473
  %v475 = vlaneseq
  %v476 = vshrl.u32 %v475, 7
  %v477 = vsub.s32 %v474, %v476
  %v478 = vrot.slane %v464, %v477
  %v479 = vcombine.low %v471, %v478
  %v481 = vunpack.c.l.s4 1966171168
  %v482 = vunpack.c.0.s8 %v481
  %v483 = vlaneseq
  %v484 = vshrl.u32 %v483, 7
  %v485 = vsub.s32 %v482, %v484
  %v486 = vrot.slane %v479, %v485
  %v488 = vlaneseq
  %vm489 = vcmp.ge.s32.totalorder %v488, 0
  %vm490 = vcmp.lt.s32.totalorder %v488, 512
  %vm491 = vmand %vm489, %vm490
  %492 = vst.msk [vmem:[%s4] sm:$0xf] %vm491, %v486
  // Predicated region
  $region18: #{scalar_nn_forward.1} parent=0 // pred_check
    _
  $region19: #{scalar_nn_forward.1} parent=0 // pred_check_branch
    %494 = sbr.rel (0) target = $region21
  $region20: #{scalar_nn_forward.1} parent=0 // pred_region
    _
  $region21: #{scalar_nn_forward.1} parent=0 // pred_fallthru
    _
  // Predicated region
  $region22: #{scalar_nn_forward.1} parent=0 // pred_check
    _
  $region23: #{scalar_nn_forward.1} parent=0 // pred_check_branch
    %496 = sbr.rel (0) target = $region25
  $region24: #{scalar_nn_forward.1} parent=0 // pred_region
    _
  $region25: #{scalar_nn_forward.1} parent=0 // pred_fallthru
    _

</llo_original>
